<compile_context>
chip_gen: v6e
topology: v6e:2x2x1
jax: 0.10.0
libtpu: 0.0.40
codegen_flags: <defaults>
</compile_context>

<pallas_src>
import jax
import jax.numpy as jnp
from jax.experimental import pallas as pl
from jax.experimental.pallas import tpu as pltpu


def _round_up(a, m):
    return ((a + m - 1) // m) * m


def _make_l_color_kernel(c, chunk_len, n_chunks, n_per_split, valid_last):
    """Per-(batch, core-split, chunk) partial-sum kernel.

    Accumulates per-channel sums of one (1, c, chunk_len) block of the
    flattened image into a resident (1, 1, c, 1) f32 output block.
    """
    valid_main = (valid_last // 128) * 128      # 128-aligned part of last chunk
    rem = valid_last - valid_main               # ragged remainder (< 128)
    last_is_full = (valid_last == chunk_len)    # last chunk has no overhang

    def reduce_sum(x):                          # (c, L) -> (c, 1) f32
        return jnp.sum(x.astype(jnp.float32), axis=-1, keepdims=True)

    def kernel(x_ref, o_ref):
        s = pl.program_id(1)                    # core-split index
        j = pl.program_id(2)                    # local chunk index
        gj = s * n_per_split + j                # global chunk index

        @pl.when(j == 0)
        def _():
            o_ref[...] = jnp.zeros_like(o_ref)

        # Interior chunks: full-width reduce, no masking.
        @pl.when(gj < n_chunks - 1)
        def _():
            o_ref[...] += reduce_sum(x_ref[0]).reshape(o_ref.shape)

        # Last chunk: may overhang the array end (unspecified data in the
        # overhang).  Reduce only the valid prefix: a static 128-aligned slice
        # for the bulk and one masked lane group for the ragged remainder.
        @pl.when(gj == n_chunks - 1)
        def _():
            if last_is_full:
                part = reduce_sum(x_ref[0])
            else:
                part = jnp.zeros((c, 1), jnp.float32)
                if valid_main > 0:
                    part = part + reduce_sum(x_ref[0, :, :valid_main])
                if rem > 0:
                    grp = x_ref[0, :, valid_main:valid_main + 128]
                    lane = jax.lax.broadcasted_iota(jnp.int32, (c, 128), 1)
                    part = part + jnp.sum(
                        jnp.where(lane < rem, grp.astype(jnp.float32), 0.0),
                        axis=-1, keepdims=True)
            o_ref[...] += part.reshape(o_ref.shape)

        # gj > n_chunks - 1 (duplicated/clamped tail when the chunk count is
        # odd under the 2-way core split): contributes nothing.

    return kernel


def l_color(x, *, max_chunk_len=128 * 1024):
    """Zero-DCE colour constancy loss. x: (B, 3, H, W). Returns (B, 1, 1, 1) f32."""
    b, c, h, w = x.shape
    assert c == 3, "L_color expects 3 channels (RGB)"
    hw = h * w

    # Free reshape of the contiguous NCHW buffer -- no padding / slicing copy.
    x_flat = x.reshape(b, c, hw)

    # Chunk length: a multiple of 128 lanes (or the whole image when tiny).
    if hw >= 128:
        chunk_len = min(max_chunk_len, _round_up(hw, 128))
        chunk_len = max(128, (chunk_len // 128) * 128)
    else:
        chunk_len = hw                           # single block == full dims
    n_chunks = pl.cdiv(hw, chunk_len)
    valid_last = hw - (n_chunks - 1) * chunk_len

    # 2-way core split over the reduction axis (v7x: both TCs busy for B==1;
    # v5e/v6e: just two sequential accumulator halves).
    num_splits = 2 if n_chunks >= 2 else 1
    n_per_split = pl.cdiv(n_chunks, num_splits)

    if num_splits * n_per_split > n_chunks:      # odd chunk count: clamp dup tail
        def in_map(i, s, j):
            return (i, 0, jnp.minimum(s * n_per_split + j, n_chunks - 1))
    else:
        def in_map(i, s, j):
            return (i, 0, s * n_per_split + j)

    kernel = _make_l_color_kernel(c, chunk_len, n_chunks, n_per_split, valid_last)

    cost = pl.CostEstimate(
        flops=b * c * hw,
        transcendentals=0,
        bytes_accessed=b * c * hw * x.dtype.itemsize + b * num_splits * c * 4,
    )

    sums = pl.pallas_call(
        kernel,
        out_shape=jax.ShapeDtypeStruct((b, num_splits, c, 1), jnp.float32),
        grid_spec=pltpu.PrefetchScalarGridSpec(
            num_scalar_prefetch=0,
            grid=(b, num_splits, n_per_split),
            in_specs=[pl.BlockSpec((1, c, chunk_len), in_map)],
            out_specs=pl.BlockSpec((1, 1, c, 1), lambda i, s, j: (i, s, 0, 0)),
        ),
        compiler_params=pltpu.CompilerParams(
            dimension_semantics=("parallel", "parallel", "arbitrary")),
        cost_estimate=cost,
    )(x_flat)

    # O(B) epilogue in plain JAX: fold core-split halves, divide by TRUE H*W,
    # then the colour-constancy combination.
    mean_rgb = jnp.sum(sums, axis=(1, 3)) / jnp.float32(hw)      # (B, 3)
    mr, mg, mb = mean_rgb[:, 0], mean_rgb[:, 1], mean_rgb[:, 2]
    drg = (mr - mg) ** 2
    drb = (mr - mb) ** 2
    dgb = (mb - mg) ** 2
    k = jnp.sqrt(drg ** 2 + drb ** 2 + dgb ** 2)
    return k.reshape(b, 1, 1, 1).astype(jnp.float32)


def _l_color_ref(x):
    mean_rgb = jnp.mean(x.astype(jnp.float32), axis=(2, 3), keepdims=True)
    mr = mean_rgb[:, 0:1]
    mg = mean_rgb[:, 1:2]
    mb = mean_rgb[:, 2:3]
    drg = (mr - mg) ** 2
    drb = (mr - mb) ** 2
    dgb = (mb - mg) ** 2
    return jnp.sqrt(drg ** 2 + drb ** 2 + dgb ** 2)


if __name__ == "__main__":
    key = jax.random.PRNGKey(0)
    k0, k1, k2, k3 = jax.random.split(key, 4)

    # (1) Small NCHW input consistent with the module: batch=2, RGB, 16x16.
    x = jax.random.uniform(k0, (2, 3, 16, 16), dtype=jnp.float32)
    out = jax.block_until_ready(l_color(x))
    ref = _l_color_ref(x)
    assert out.shape == (2, 1, 1, 1), out.shape
    assert jnp.allclose(out, ref, rtol=1e-3, atol=1e-6), (out, ref)

    # (2) Multi-chunk reduction + 2-way core split + ragged (non-128-aligned)
    #     overhanging last chunk, with a tiny chunk so several grid steps run.
    x2 = jax.random.uniform(k1, (2, 3, 54, 54), dtype=jnp.float32)
    out2 = jax.block_until_ready(l_color(x2, max_chunk_len=512))
    ref2 = _l_color_ref(x2)
    assert out2.shape == (2, 1, 1, 1), out2.shape
    assert jnp.allclose(out2, ref2, rtol=1e-3, atol=1e-6), (out2, ref2)

    # (2b) Odd chunk count -> exercises the clamped duplicate-tail index map.
    out2b = jax.block_until_ready(l_color(x2, max_chunk_len=640))
    assert jnp.allclose(out2b, ref2, rtol=1e-3, atol=1e-6), (out2b, ref2)

    # (3) bf16 input consumed directly (f32 accumulation in-kernel); also hits
    #     the ragged overhang path at the default chunk size.
    x3 = jax.random.uniform(k2, (2, 3, 40, 40), dtype=jnp.float32).astype(jnp.bfloat16)
    out3 = jax.block_until_ready(l_color(x3))
    ref3 = _l_color_ref(x3)
    assert jnp.allclose(out3, ref3, rtol=1e-2, atol=1e-5), (out3, ref3)

    # (4) Tiny image (< 128 pixels): single exact block, no overhang.
    x4 = jax.random.uniform(k3, (1, 3, 7, 9), dtype=jnp.float32)
    out4 = jax.block_until_ready(l_color(x4))
    ref4 = _l_color_ref(x4)
    assert jnp.allclose(out4, ref4, rtol=1e-3, atol=1e-6), (out4, ref4)

    print("KERNEL_OK")
</pallas_src>

<mosaic_0001>
module attributes {stable_mosaic.version = 11 : i64} {
  func.func @kernel(%arg0: i32, %arg1: i32, %arg2: i32, %arg3: memref<1x3x256xf32, #tpu.memory_space<vmem>>, %arg4: memref<1x1x3x1xf32, #tpu.memory_space<vmem>>) attributes {dimension_semantics = [#tpu.dimension_semantics<parallel>, #tpu.dimension_semantics<parallel>, #tpu.dimension_semantics<arbitrary>], iteration_bounds = array<i64: 2, 1, 1>, scalar_prefetch = 0 : i64, scratch_operands = 0 : i64, tpu.core_type = #tpu.core_type<tc>, window_params = [{transform_indices = @transform_0, window_bounds = array<i64: 1, 3, 256>}, {transform_indices = @transform_1, window_bounds = array<i64: 1, 1, 3, 1>}]} {
    %c1_i32 = arith.constant 1 : i32
    %0 = arith.muli %arg1, %c1_i32 : i32
    %1 = arith.addi %0, %arg2 : i32
    %c0_i32 = arith.constant 0 : i32
    %2 = arith.cmpi eq, %arg2, %c0_i32 : i32
    %3 = arith.extui %2 : i1 to i32
    %c0_i32_0 = arith.constant 0 : i32
    %4 = arith.cmpi ne, %3, %c0_i32_0 : i32
    scf.if %4 {
      %cst = arith.constant 0.000000e+00 : f32
      %11 = vector.broadcast %cst : f32 to vector<1x1x3x1xf32>
      %c0 = arith.constant 0 : index
      %c0_5 = arith.constant 0 : index
      %c0_6 = arith.constant 0 : index
      %c0_7 = arith.constant 0 : index
      %12 = vector.load %arg4[%c0, %c0_5, %c0_6, %c0_7] : memref<1x1x3x1xf32, #tpu.memory_space<vmem>>, vector<1x1x3x1xf32>
      tpu.vector_store %arg4[%c0, %c0_5, %c0_6, %c0_7], %11 {strides = array<i32>} : memref<1x1x3x1xf32, #tpu.memory_space<vmem>>, vector<1x1x3x1xf32>,
    } else {
    }
    %c0_i32_1 = arith.constant 0 : i32
    %5 = arith.cmpi slt, %1, %c0_i32_1 : i32
    %6 = arith.extui %5 : i1 to i32
    %c0_i32_2 = arith.constant 0 : i32
    %7 = arith.cmpi ne, %6, %c0_i32_2 : i32
    scf.if %7 {
      %c0 = arith.constant 0 : index
      %c0_5 = arith.constant 0 : index
      %c0_6 = arith.constant 0 : index
      %c0_7 = arith.constant 0 : index
      %11 = vector.load %arg4[%c0, %c0_5, %c0_6, %c0_7] : memref<1x1x3x1xf32, #tpu.memory_space<vmem>>, vector<1x1x3x1xf32>
      %c0_8 = arith.constant 0 : index
      %c0_9 = arith.constant 0 : index
      %c0_10 = arith.constant 0 : index
      %12 = vector.load %arg3[%c0_8, %c0_9, %c0_10] : memref<1x3x256xf32, #tpu.memory_space<vmem>>, vector<1x3x256xf32>
      %13 = vector.shape_cast %12 : vector<1x3x256xf32> to vector<3x256xf32>
      %cst = arith.constant dense<0.000000e+00> : vector<3xf32>
      %14 = vector.multi_reduction <add>, %13, %cst [1] : vector<3x256xf32> to vector<3xf32>
      %15 = vector.shape_cast %14 : vector<3xf32> to vector<3x1xf32>
      %16 = vector.shape_cast %15 : vector<3x1xf32> to vector<1x1x3x1xf32>
      %17 = arith.addf %11, %16 : vector<1x1x3x1xf32>
      %c0_11 = arith.constant 0 : index
      %c0_12 = arith.constant 0 : index
      %c0_13 = arith.constant 0 : index
      %c0_14 = arith.constant 0 : index
      %18 = vector.load %arg4[%c0_11, %c0_12, %c0_13, %c0_14] : memref<1x1x3x1xf32, #tpu.memory_space<vmem>>, vector<1x1x3x1xf32>
      tpu.vector_store %arg4[%c0_11, %c0_12, %c0_13, %c0_14], %17 {strides = array<i32>} : memref<1x1x3x1xf32, #tpu.memory_space<vmem>>, vector<1x1x3x1xf32>,
    } else {
    }
    %c0_i32_3 = arith.constant 0 : i32
    %8 = arith.cmpi eq, %1, %c0_i32_3 : i32
    %9 = arith.extui %8 : i1 to i32
    %c0_i32_4 = arith.constant 0 : i32
    %10 = arith.cmpi ne, %9, %c0_i32_4 : i32
    scf.if %10 {
      %c0 = arith.constant 0 : index
      %c0_5 = arith.constant 0 : index
      %c0_6 = arith.constant 0 : index
      %11 = vector.load %arg3[%c0, %c0_5, %c0_6] : memref<1x3x256xf32, #tpu.memory_space<vmem>>, vector<1x3x256xf32>
      %12 = vector.shape_cast %11 : vector<1x3x256xf32> to vector<3x256xf32>
      %cst = arith.constant dense<0.000000e+00> : vector<3xf32>
      %13 = vector.multi_reduction <add>, %12, %cst [1] : vector<3x256xf32> to vector<3xf32>
      %14 = vector.shape_cast %13 : vector<3xf32> to vector<3x1xf32>
      %c0_7 = arith.constant 0 : index
      %c0_8 = arith.constant 0 : index
      %c0_9 = arith.constant 0 : index
      %c0_10 = arith.constant 0 : index
      %15 = vector.load %arg4[%c0_7, %c0_8, %c0_9, %c0_10] : memref<1x1x3x1xf32, #tpu.memory_space<vmem>>, vector<1x1x3x1xf32>
      %16 = vector.shape_cast %14 : vector<3x1xf32> to vector<1x1x3x1xf32>
      %17 = arith.addf %15, %16 : vector<1x1x3x1xf32>
      %c0_11 = arith.constant 0 : index
      %c0_12 = arith.constant 0 : index
      %c0_13 = arith.constant 0 : index
      %c0_14 = arith.constant 0 : index
      %18 = vector.load %arg4[%c0_11, %c0_12, %c0_13, %c0_14] : memref<1x1x3x1xf32, #tpu.memory_space<vmem>>, vector<1x1x3x1xf32>
      tpu.vector_store %arg4[%c0_11, %c0_12, %c0_13, %c0_14], %17 {strides = array<i32>} : memref<1x1x3x1xf32, #tpu.memory_space<vmem>>, vector<1x1x3x1xf32>,
    } else {
    }
    return
  }
  func.func @transform_0(%arg0: i32, %arg1: i32, %arg2: i32) -> (i32, i32, i32) {
    %c1_i32 = arith.constant 1 : i32
    %0 = arith.muli %arg1, %c1_i32 : i32
    %1 = arith.addi %0, %arg2 : i32
    %c0_i32 = arith.constant 0 : i32
    %c0_i32_0 = arith.constant 0 : i32
    return %arg0, %c0_i32, %1 : i32, i32, i32
  }
  func.func @transform_1(%arg0: i32, %arg1: i32, %arg2: i32) -> (i32, i32, i32, i32) {
    %c0_i32 = arith.constant 0 : i32
    %c0_i32_0 = arith.constant 0 : i32
    %c0_i32_1 = arith.constant 0 : i32
    return %arg0, %arg1, %c0_i32, %c0_i32_0 : i32, i32, i32, i32
  }
}

</mosaic_0001>

<llo_original>
// kernel: tpu_custom_call.1
$region0: #{tpu_custom_call.1}
  #allocation0 [shape = 'u32[]', space=smem, size = 0x4, offset = 0x4, fixed_abs, tag = 'smem constant byte address 0x4 - core index']
  #allocation1 [shape = 'u32[144,128]{1,0:T(1,128)}', space=vmem, size = 0x12000, scoped, tag = 'internal scratch']
  %s0 = inlined_call_operand.vmem [shape: f32[2,3,256], index: 0, kind: input, shape index: {}]
  %s1 = inlined_call_operand.vmem [shape: f32[2,1,3,1], index: 1, kind: output, shape index: {}]
  %s2 = sld [smem:[#allocation0]]
  $region49: #{tpu_custom_call.1} parent=0
    _
  %s4 = ssub.s32 1, %s2
  %s5 = scalar_select 0, %s4, %s2
  loop: start=0, step=1, limit=4
  $region2: #{tpu_custom_call.1} parent=0 // loop_pre_header
    _
  $region3: #{tpu_custom_call.1} parent=0 // loop_header
    %s7 = sphi 0, %s11
    %p8 = scmp.ge.s32.totalorder %s7, 4
    %s14 = sphi 0, %s33
    %s15 = sphi 0, %s29
    %s16 = sphi 0, %s25
    %s17 = sphi 0, %s14
    %s18 = sphi 0, %s15
    %s19 = sphi 0, %s16
    %s20 = sphi 0, %s17
    %s21 = sphi 0, %s18
    %s22 = sphi 0, %s19
    %s40 = sphi 0, %s42
    %s43 = sphi 0, %s40
    %s44 = sphi 0, %s43
    %s60 = sphi 0, %s44
    %s68 = sphi 0, %s70
    %s71 = sphi 0, %s68
    %s72 = sphi 0, %s71
    %s88 = sphi 0, %s72
  $region4: #{tpu_custom_call.1} parent=0 // loop_header_branch
    %10 = sbr.rel (%p8) target = $region8
  $region5: #{tpu_custom_call.1} parent=0 // loop_body
    %s12 = ssub.s32 %s7, 1
    %s13 = ssub.s32 %s7, 2
    %s23 = sadd.s32 1, %s16
    %p24 = scmp.ge.s32.totalorder %s23, 1
    %s25 = scalar_select %p24, 0, %s23
    %s26 = sadd.s32 1, %s15
    %s27 = scalar_select %p24, %s26, %s15
    %p28 = scmp.ge.s32.totalorder %s27, 1
    %s29 = scalar_select %p28, 0, %s27
    %s30 = sadd.s32 1, %s14
    %s31 = scalar_select %p28, %s30, %s14
    %p32 = scmp.ge.s32.totalorder %s31, 2
    %s33 = scalar_select %p32, 0, %s31
    %s34 = sadd.s32 %s15, %s16
    %s35 = sadd.s32 %s29, %s25
    %s36 = ssub.s32 %s14, %s33
    %s37 = ssub.s32 %s34, %s35
    %s38 = sor.u32 %s36, %s37
    %p39 = scmp.eq.s32.totalorder %s38, 0
    %s41 = sadd.s32 %s40, 1
    %s42 = scalar_select %p39, %s40, %s41
    %p45 = pneg %p39
    %p46 = scmp.eq.s32.totalorder %s7, 1
    %p47 = por %p45, %p46
    %p48 = scmp.ne.s32.totalorder %s40, %s43
    %p49 = scmp.eq.s32.totalorder %s7, 0
    %p50 = por %p48, %p49
    %p51 = scmp.ne.s32.totalorder %s40, %s43
    %p52 = scmp.eq.s32.totalorder %s12, 1
    %p53 = por %p51, %p52
    %p54 = scmp.ne.s32.totalorder %s43, %s44
    %p55 = scmp.eq.s32.totalorder %s12, 0
    %p56 = por %p54, %p55
    %p57 = scmp.ne.s32.totalorder %s43, %s44
    %p58 = scmp.eq.s32.totalorder %s13, 1
    %p59 = por %p57, %p58
    %p61 = scmp.ne.s32.totalorder %s44, %s60
    %p62 = scmp.eq.s32.totalorder %s13, 0
    %p63 = por %p61, %p62
    %s64 = ssub.s32 %s14, %s33
    %s65 = ssub.s32 %s15, %s29
    %s66 = sor.u32 %s64, %s65
    %p67 = scmp.eq.s32.totalorder %s66, 0
    %s69 = sadd.s32 %s68, 1
    %s70 = scalar_select %p67, %s68, %s69
    %p73 = pneg %p67
    %p74 = scmp.eq.s32.totalorder %s7, 1
    %p75 = por %p73, %p74
    %p76 = scmp.ne.s32.totalorder %s68, %s71
    %p77 = scmp.eq.s32.totalorder %s7, 0
    %p78 = por %p76, %p77
    %p79 = scmp.ne.s32.totalorder %s68, %s71
    %p80 = scmp.eq.s32.totalorder %s12, 1
    %p81 = por %p79, %p80
    %p82 = scmp.ne.s32.totalorder %s71, %s72
    %p83 = scmp.eq.s32.totalorder %s12, 0
    %p84 = por %p82, %p83
    %p85 = scmp.ne.s32.totalorder %s71, %s72
    %p86 = scmp.eq.s32.totalorder %s13, 1
    %p87 = por %p85, %p86
    %p89 = scmp.ne.s32.totalorder %s72, %s88
    %p90 = scmp.eq.s32.totalorder %s13, 0
    %p91 = por %p89, %p90
    %p92 = scmp.le.s32.totalorder 1, %s7
    %p93 = scmp.lt.s32.totalorder %s7, 3
    %p94 = pnand %p92, %p93
    %p95 = pneg %p94
    // Predicated region
    $region9: #{tpu_custom_call.1} parent=5 // pred_check
      _
    $region10: #{tpu_custom_call.1} parent=5 // pred_check_branch
      %97 = sbr.rel (%p94) target = $region12
    $region11: #{tpu_custom_call.1} parent=5 // pred_region
      %s98 = ssub.s32 %s7, 1
    $region12: #{tpu_custom_call.1} parent=5 // pred_fallthru
      _
    %p99 = scmp.lt.s32.totalorder %s7, 2
    // Predicated region
    $region13: #{tpu_custom_call.1} parent=5 // pred_check
      %p100 = pneg %p99
    $region14: #{tpu_custom_call.1} parent=5 // pred_check_branch
      %102 = sbr.rel (%p100) target = $region16
    $region15: #{tpu_custom_call.1} parent=5 // pred_region
      // Predicated region
      $region17: #{tpu_custom_call.1} parent=15 // pred_check
        %p103 = pneg %p50
      $region18: #{tpu_custom_call.1} parent=15 // pred_check_branch
        %105 = sbr.rel (%p103) target = $region20
      $region19: #{tpu_custom_call.1} parent=15 // pred_region
        %s106 = sadd.s32 %s15, %s16
        %s107 = smul.u32 2, %s106
        %p108 = scmp.lt.s32.totalorder %s14, 1
        %s109 = scalar_select %p108, %s14, 1
        %p110 = scmp.lt.s32.totalorder %s107, 1
        %s111 = scalar_select %p110, %s107, 1
        %s112 = smul.addr %s109, 2
        %s113 = sadd.s32 %s111, %s112
        %s114 = smul.addr %s113, 4
        %s115 = scalar_lea.vmem %s0, %s114
        %s116 = sadd.s32 %s15, %s16
        %s117 = smul.u32 2, %s116
      $region20: #{tpu_custom_call.1} parent=15 // pred_fallthru
        _
    $region16: #{tpu_custom_call.1} parent=5 // pred_fallthru
      _
    %p118 = scmp.le.s32.totalorder 1, %s7
    %p119 = scmp.lt.s32.totalorder %s7, 3
    %p120 = pnand %p118, %p119
    %p121 = pneg %p120
    // Predicated region
    $region21: #{tpu_custom_call.1} parent=5 // pred_check
      _
    $region22: #{tpu_custom_call.1} parent=5 // pred_check_branch
      %123 = sbr.rel (%p120) target = $region24
    $region23: #{tpu_custom_call.1} parent=5 // pred_region
      %s124 = ssub.s32 %s7, 1
      %s125 = sadd.s32 %s18, %s19
      %s126 = smul.u32 2, %s125
      %p127 = scmp.lt.s32.totalorder %s17, 1
      %s128 = scalar_select %p127, %s17, 1
      %p129 = scmp.lt.s32.totalorder %s126, 1
      %s130 = scalar_select %p129, %s126, 1
      %s131 = smul.addr %s128, 2
      %s132 = sadd.s32 %s130, %s131
      %s133 = smul.addr %s132, 4
      %s134 = scalar_lea.vmem %s0, %s133
      %p135 = pneg %p56
      %p136 = pneg %p53
      %p137 = pneg %p84
      %p138 = pneg %p81
      %p139 = scmp.lt.s32.totalorder %s17, 1
      %s140 = scalar_select %p139, %s17, 1
      %p141 = scmp.lt.s32.totalorder %s18, 0
      %s142 = scalar_select %p141, %s18, 0
      %s143 = sadd.s32 %s142, %s140
      %s144 = smul.addr %s143, 4
      %s145 = scalar_lea.vmem %s1, %s144
      %s146 = sadd.s32 %s18, %s19
      %s147 = smul.u32 2, %s146
      %p148 = scmp.lt.s32.totalorder %s17, 1
      %s149 = scalar_select %p148, %s17, 1
      %p150 = scmp.lt.s32.totalorder %s147, 1
      %s151 = scalar_select %p150, %s147, 1
      %s152 = smul.addr %s149, 2
      %s153 = sadd.s32 %s151, %s152
      %s154 = smul.addr %s153, 4
      %s155 = scalar_lea.vmem %s0, %s154
      %s156 = sadd.s32 %s18, %s19
      %s157 = smul.u32 2, %s156
      %p158 = scmp.lt.s32.totalorder %s17, 1
      %s159 = scalar_select %p158, %s17, 1
      %p160 = scmp.lt.s32.totalorder %s18, 0
      %s161 = scalar_select %p160, %s18, 0
      %s162 = sadd.s32 %s161, %s159
      %s163 = smul.addr %s162, 4
      %s164 = scalar_lea.vmem %s1, %s163
      %s165 = sadd.s32 %s18, %s19
      %p166 = scmp.eq.s32.totalorder %s19, 0
      // Predicated region
      $region25: #{tpu_custom_call.1} parent=23 // pred_check
        %p167 = pneg %p166
      $region26: #{tpu_custom_call.1} parent=23 // pred_check_branch
        %169 = sbr.rel (%p167) target = $region28
      $region27: #{tpu_custom_call.1} parent=23 // pred_region
        %vm170 = vcmask 2048
        %171 = vst.msk [vmem:[%s164] sm:$0x7] %vm170, 0.0
      $region28: #{tpu_custom_call.1} parent=23 // pred_fallthru
        _
      %p172 = scmp.lt.s32.totalorder %s165, 0
      // Predicated region
      $region29: #{tpu_custom_call.1} parent=23 // pred_check
        %p173 = pneg %p172
      $region30: #{tpu_custom_call.1} parent=23 // pred_check_branch
        %175 = sbr.rel (%p173) target = $region32
      $region31: #{tpu_custom_call.1} parent=23 // pred_region
        %v176 = vld [vmem:[%s164] sm:$0x7]
        %v177 = vld [vmem:[%s155] sm:$0x77]
        %v179 = vcombine.high %v177, %v177
        %vm181 = vcmask 1042432
        %v182 = vsel %vm181, %v177, 0.0
        %v183 = vsel %vm181, %v179, 0.0
        %v184 = vadd.f32 %v182, %v183
        %185 = vadd.xlane.f32.xlu0 %v184
        %v186 = vpop.xlane.xlu0 %185
        %v187 = vadd.f32 %v176, %v186
        %vm188 = vcmask 2048
        %189 = vst.msk [vmem:[%s164] sm:$0x7] %vm188, %v187
      $region32: #{tpu_custom_call.1} parent=23 // pred_fallthru
        _
      %p190 = scmp.eq.s32.totalorder %s165, 0
      // Predicated region
      $region33: #{tpu_custom_call.1} parent=23 // pred_check
        %p191 = pneg %p190
      $region34: #{tpu_custom_call.1} parent=23 // pred_check_branch
        %193 = sbr.rel (%p191) target = $region36
      $region35: #{tpu_custom_call.1} parent=23 // pred_region
        %v194 = vld [vmem:[%s155] sm:$0x77]
        %v196 = vcombine.high %v194, %v194
        %vm198 = vcmask 1042432
        %v199 = vsel %vm198, %v194, 0.0
        %v200 = vsel %vm198, %v196, 0.0
        %v201 = vadd.f32 %v199, %v200
        %202 = vadd.xlane.f32.xlu0 %v201
        %v203 = vpop.xlane.xlu0 %202
        %v204 = vld [vmem:[%s164] sm:$0x7]
        %v205 = vadd.f32 %v204, %v203
        %vm206 = vcmask 2048
        %207 = vst.msk [vmem:[%s164] sm:$0x7] %vm206, %v205
      $region36: #{tpu_custom_call.1} parent=23 // pred_fallthru
        _
      %p208 = scmp.lt.s32.totalorder %s17, 1
      %s209 = scalar_select %p208, %s17, 1
      %p210 = scmp.lt.s32.totalorder %s18, 0
      %s211 = scalar_select %p210, %s18, 0
      %s212 = sadd.s32 %s211, %s209
      %s213 = smul.addr %s212, 4
      %s214 = scalar_lea.vmem %s1, %s213
      // Predicated region
      $region37: #{tpu_custom_call.1} parent=23 // pred_check
        %p215 = pneg %p81
      $region38: #{tpu_custom_call.1} parent=23 // pred_check_branch
        %217 = sbr.rel (%p215) target = $region40
      $region39: #{tpu_custom_call.1} parent=23 // pred_region
        _
      $region40: #{tpu_custom_call.1} parent=23 // pred_fallthru
        _
    $region24: #{tpu_custom_call.1} parent=5 // pred_fallthru
      _
    %p218 = scmp.le.s32.totalorder 2, %s7
    // Predicated region
    $region41: #{tpu_custom_call.1} parent=5 // pred_check
      %p219 = pneg %p218
    $region42: #{tpu_custom_call.1} parent=5 // pred_check_branch
      %221 = sbr.rel (%p219) target = $region44
    $region43: #{tpu_custom_call.1} parent=5 // pred_region
      %s222 = ssub.s32 %s7, 2
      // Predicated region
      $region45: #{tpu_custom_call.1} parent=43 // pred_check
        %p223 = pneg %p87
      $region46: #{tpu_custom_call.1} parent=43 // pred_check_branch
        %225 = sbr.rel (%p223) target = $region48
      $region47: #{tpu_custom_call.1} parent=43 // pred_region
        %p226 = scmp.lt.s32.totalorder %s20, 1
        %s227 = scalar_select %p226, %s20, 1
        %p228 = scmp.lt.s32.totalorder %s21, 0
        %s229 = scalar_select %p228, %s21, 0
        %s230 = sadd.s32 %s229, %s227
        %s231 = smul.addr %s230, 4
        %s232 = scalar_lea.vmem %s1, %s231
      $region48: #{tpu_custom_call.1} parent=43 // pred_fallthru
        _
    $region44: #{tpu_custom_call.1} parent=5 // pred_fallthru
      _
  $region6: #{tpu_custom_call.1} parent=0 // loop_footer
    %s11 = sadd.s32 1, %s7
  $region7: #{tpu_custom_call.1} parent=0 // loop_footer_branch
    %6 = sbr.rel target = $region3
  $region8: #{tpu_custom_call.1} parent=0 // loop_exit
    _

</llo_original>
